<compile_context>
chip_gen: v7x
topology: tpu7x:2x2x1
jax: 0.10.0
libtpu: 0.0.40
codegen_flags: <defaults>
</compile_context>

<pallas_src>
import functools

import jax
import jax.numpy as jnp
import numpy as np
from jax.experimental import pallas as pl
from jax.experimental.pallas import tpu as pltpu


def make_freq_bands(n_freqs: int, log_space: bool) -> np.ndarray:
    """Matches the PyTorch module's freq_bands construction."""
    if log_space:
        return (2.0 ** np.linspace(0.0, n_freqs - 1, n_freqs)).astype(np.float32)
    return np.linspace(2.0 ** 0.0, 2.0 ** (n_freqs - 1), n_freqs).astype(np.float32)


def _pe_kernel(xt_ref, ot_ref, *, freqs):
    """Lane-dense positional-encoding tile.

    xt_ref: (d_input, tile_lanes)            VMEM tile (x^T -> N on lanes)
    ot_ref: (1 + 2*K, d_input, tile_lanes)   VMEM tile; slab j is one output band
    """
    x = xt_ref[...]
    ot_ref[0] = x                              # identity band

    xf32 = x.astype(jnp.float32)
    for k, f in enumerate(freqs):
        xf = xf32 * f
        ot_ref[1 + 2 * k] = jnp.sin(xf).astype(ot_ref.dtype)
        ot_ref[2 + 2 * k] = jnp.cos(xf).astype(ot_ref.dtype)


def positional_encoder(x, n_freqs: int, log_space: bool = False, *,
                       tile_lanes: int | None = None):
    """JAX/Pallas equivalent of PositionalEncoder.forward.

    Accepts x of shape (..., d_input); returns (..., d_input * (1 + 2*n_freqs)).
    """
    orig_shape = x.shape
    d_input = int(orig_shape[-1])
    n_bands = 1 + 2 * n_freqs
    d_output = d_input * n_bands

    x2 = x.reshape(-1, d_input)
    n = x2.shape[0]
    xt = x2.T  # (d_input, N): N on the lane axis -> wide, unmasked stores

    # --- tile sizing -------------------------------------------------------
    itemsize = jnp.dtype(x.dtype).itemsize
    d_in_pad = ((d_input + 7) // 8) * 8            # sublane padding of input tile
    out_rows_pad = n_bands * d_in_pad              # each output slab padded to 8 sublanes
    if tile_lanes is None:
        # Large tiles (per-grid-step overhead ~0.35us) while keeping the
        # double-buffered in+out footprint well under the smallest scoped-VMEM
        # default across generations (v5e: 16 MiB).
        budget_bytes = 8 * 1024 * 1024
        per_lane_bytes = 2 * (d_in_pad + out_rows_pad) * itemsize
        tile_lanes = min(8192, max(128, budget_bytes // per_lane_bytes))
    tile_lanes = max(128, (int(tile_lanes) // 128) * 128)   # lane multiple of 128
    n_up = ((n + 127) // 128) * 128
    tile_lanes = min(tile_lanes, n_up)                       # don't exceed N (rounded up)

    grid = (pl.cdiv(n, tile_lanes),)   # ragged last tile is clipped by Pallas

    freqs = tuple(float(f) for f in make_freq_bands(n_freqs, log_space))
    kernel = functools.partial(_pe_kernel, freqs=freqs)

    out3 = pl.pallas_call(
        kernel,
        out_shape=jax.ShapeDtypeStruct((n_bands, d_input, n), x.dtype),
        grid=grid,
        in_specs=[pl.BlockSpec((d_input, tile_lanes), lambda i: (0, i))],
        out_specs=pl.BlockSpec((n_bands, d_input, tile_lanes), lambda i: (0, 0, i)),
        compiler_params=pltpu.CompilerParams(
            dimension_semantics=("parallel",),       # shards across v7x's 2 TCs
            vmem_limit_bytes=32 * 1024 * 1024,       # explicit budget (v5e default is 16 MiB)
        ),
    )(xt)

    # (1+2K, d, N) is row-major identical to (d_output, N); transpose back to
    # the PyTorch layout [x, sin f0, cos f0, sin f1, cos f1, ...] on the last dim.
    out = out3.reshape(d_output, n).T
    return out.reshape(*orig_shape[:-1], d_output)


def positional_encoder_ref(x, n_freqs: int, log_space: bool = False):
    """Pure-JAX reference matching the PyTorch forward."""
    freqs = make_freq_bands(n_freqs, log_space)
    parts = [x]
    for f in freqs:
        parts.append(jnp.sin(x * f))
        parts.append(jnp.cos(x * f))
    return jnp.concatenate(parts, axis=-1)


if __name__ == "__main__":
    key = jax.random.PRNGKey(0)

    # Small NeRF-like shape: (2, 500) 3-D coordinates -> N=1000 flattened rows
    # (not a multiple of 128, exercising the clipped ragged last tile).
    d_input, n_freqs = 3, 4
    x = jax.random.normal(key, (2, 500, d_input), dtype=jnp.float32)

    # Linear-spaced bands (default PyTorch config); small tile forces a
    # multi-step grid with a partial final tile.
    out = positional_encoder(x, n_freqs=n_freqs, log_space=False, tile_lanes=256)
    out = jax.block_until_ready(out)
    ref = positional_encoder_ref(x, n_freqs=n_freqs, log_space=False)
    assert out.shape == (2, 500, d_input * (1 + 2 * n_freqs)), out.shape
    np.testing.assert_allclose(np.asarray(out), np.asarray(ref), rtol=1e-6, atol=1e-6)

    # Log-spaced bands with automatic (single-tile) tiling.
    out2 = positional_encoder(x, n_freqs=6, log_space=True)
    out2 = jax.block_until_ready(out2)
    ref2 = positional_encoder_ref(x, n_freqs=6, log_space=True)
    assert out2.shape == (2, 500, d_input * (1 + 2 * 6)), out2.shape
    np.testing.assert_allclose(np.asarray(out2), np.asarray(ref2), rtol=1e-6, atol=1e-6)

    print("KERNEL_OK")
</pallas_src>

<mosaic_0001>
module attributes {stable_mosaic.version = 11 : i64} {
  func.func @_pe_kernel(%arg0: i32, %arg1: memref<3x256xf32, #tpu.memory_space<vmem>>, %arg2: memref<9x3x256xf32, #tpu.memory_space<vmem>>) attributes {dimension_semantics = [#tpu.dimension_semantics<parallel>], iteration_bounds = array<i64: 4>, scalar_prefetch = 0 : i64, scratch_operands = 0 : i64, tpu.core_type = #tpu.core_type<tc>, window_params = [{transform_indices = @transform_0, window_bounds = array<i64: 3, 256>}, {transform_indices = @transform_1, window_bounds = array<i64: 9, 3, 256>}]} {
    %c0 = arith.constant 0 : index
    %c0_0 = arith.constant 0 : index
    %0 = vector.load %arg1[%c0, %c0_0] : memref<3x256xf32, #tpu.memory_space<vmem>>, vector<3x256xf32>
    %c0_1 = arith.constant 0 : index
    %c0_2 = arith.constant 0 : index
    %c0_3 = arith.constant 0 : index
    %1 = vector.load %arg2[%c0_1, %c0_2, %c0_3] : memref<9x3x256xf32, #tpu.memory_space<vmem>>, vector<1x3x256xf32>
    %2 = vector.shape_cast %1 : vector<1x3x256xf32> to vector<3x256xf32>
    %3 = vector.shape_cast %0 : vector<3x256xf32> to vector<1x3x256xf32>
    tpu.vector_store %arg2[%c0_1, %c0_2, %c0_3], %3 {strides = array<i32>} : memref<9x3x256xf32, #tpu.memory_space<vmem>>, vector<1x3x256xf32>,
    %cst = arith.constant 1.000000e+00 : f32
    %4 = vector.broadcast %cst : f32 to vector<3x256xf32>
    %5 = arith.mulf %0, %4 : vector<3x256xf32>
    %6 = math.sin %5 : vector<3x256xf32>
    %c1 = arith.constant 1 : index
    %c0_4 = arith.constant 0 : index
    %c0_5 = arith.constant 0 : index
    %7 = vector.load %arg2[%c1, %c0_4, %c0_5] : memref<9x3x256xf32, #tpu.memory_space<vmem>>, vector<1x3x256xf32>
    %8 = vector.shape_cast %7 : vector<1x3x256xf32> to vector<3x256xf32>
    %9 = vector.shape_cast %6 : vector<3x256xf32> to vector<1x3x256xf32>
    tpu.vector_store %arg2[%c1, %c0_4, %c0_5], %9 {strides = array<i32>} : memref<9x3x256xf32, #tpu.memory_space<vmem>>, vector<1x3x256xf32>,
    %10 = math.cos %5 : vector<3x256xf32>
    %c2 = arith.constant 2 : index
    %c0_6 = arith.constant 0 : index
    %c0_7 = arith.constant 0 : index
    %11 = vector.load %arg2[%c2, %c0_6, %c0_7] : memref<9x3x256xf32, #tpu.memory_space<vmem>>, vector<1x3x256xf32>
    %12 = vector.shape_cast %11 : vector<1x3x256xf32> to vector<3x256xf32>
    %13 = vector.shape_cast %10 : vector<3x256xf32> to vector<1x3x256xf32>
    tpu.vector_store %arg2[%c2, %c0_6, %c0_7], %13 {strides = array<i32>} : memref<9x3x256xf32, #tpu.memory_space<vmem>>, vector<1x3x256xf32>,
    %cst_8 = arith.constant 3.33333325 : f32
    %14 = vector.broadcast %cst_8 : f32 to vector<3x256xf32>
    %15 = arith.mulf %0, %14 : vector<3x256xf32>
    %16 = math.sin %15 : vector<3x256xf32>
    %c3 = arith.constant 3 : index
    %c0_9 = arith.constant 0 : index
    %c0_10 = arith.constant 0 : index
    %17 = vector.load %arg2[%c3, %c0_9, %c0_10] : memref<9x3x256xf32, #tpu.memory_space<vmem>>, vector<1x3x256xf32>
    %18 = vector.shape_cast %17 : vector<1x3x256xf32> to vector<3x256xf32>
    %19 = vector.shape_cast %16 : vector<3x256xf32> to vector<1x3x256xf32>
    tpu.vector_store %arg2[%c3, %c0_9, %c0_10], %19 {strides = array<i32>} : memref<9x3x256xf32, #tpu.memory_space<vmem>>, vector<1x3x256xf32>,
    %20 = math.cos %15 : vector<3x256xf32>
    %c4 = arith.constant 4 : index
    %c0_11 = arith.constant 0 : index
    %c0_12 = arith.constant 0 : index
    %21 = vector.load %arg2[%c4, %c0_11, %c0_12] : memref<9x3x256xf32, #tpu.memory_space<vmem>>, vector<1x3x256xf32>
    %22 = vector.shape_cast %21 : vector<1x3x256xf32> to vector<3x256xf32>
    %23 = vector.shape_cast %20 : vector<3x256xf32> to vector<1x3x256xf32>
    tpu.vector_store %arg2[%c4, %c0_11, %c0_12], %23 {strides = array<i32>} : memref<9x3x256xf32, #tpu.memory_space<vmem>>, vector<1x3x256xf32>,
    %cst_13 = arith.constant 5.66666651 : f32
    %24 = vector.broadcast %cst_13 : f32 to vector<3x256xf32>
    %25 = arith.mulf %0, %24 : vector<3x256xf32>
    %26 = math.sin %25 : vector<3x256xf32>
    %c5 = arith.constant 5 : index
    %c0_14 = arith.constant 0 : index
    %c0_15 = arith.constant 0 : index
    %27 = vector.load %arg2[%c5, %c0_14, %c0_15] : memref<9x3x256xf32, #tpu.memory_space<vmem>>, vector<1x3x256xf32>
    %28 = vector.shape_cast %27 : vector<1x3x256xf32> to vector<3x256xf32>
    %29 = vector.shape_cast %26 : vector<3x256xf32> to vector<1x3x256xf32>
    tpu.vector_store %arg2[%c5, %c0_14, %c0_15], %29 {strides = array<i32>} : memref<9x3x256xf32, #tpu.memory_space<vmem>>, vector<1x3x256xf32>,
    %30 = math.cos %25 : vector<3x256xf32>
    %c6 = arith.constant 6 : index
    %c0_16 = arith.constant 0 : index
    %c0_17 = arith.constant 0 : index
    %31 = vector.load %arg2[%c6, %c0_16, %c0_17] : memref<9x3x256xf32, #tpu.memory_space<vmem>>, vector<1x3x256xf32>
    %32 = vector.shape_cast %31 : vector<1x3x256xf32> to vector<3x256xf32>
    %33 = vector.shape_cast %30 : vector<3x256xf32> to vector<1x3x256xf32>
    tpu.vector_store %arg2[%c6, %c0_16, %c0_17], %33 {strides = array<i32>} : memref<9x3x256xf32, #tpu.memory_space<vmem>>, vector<1x3x256xf32>,
    %cst_18 = arith.constant 8.000000e+00 : f32
    %34 = vector.broadcast %cst_18 : f32 to vector<3x256xf32>
    %35 = arith.mulf %0, %34 : vector<3x256xf32>
    %36 = math.sin %35 : vector<3x256xf32>
    %c7 = arith.constant 7 : index
    %c0_19 = arith.constant 0 : index
    %c0_20 = arith.constant 0 : index
    %37 = vector.load %arg2[%c7, %c0_19, %c0_20] : memref<9x3x256xf32, #tpu.memory_space<vmem>>, vector<1x3x256xf32>
    %38 = vector.shape_cast %37 : vector<1x3x256xf32> to vector<3x256xf32>
    %39 = vector.shape_cast %36 : vector<3x256xf32> to vector<1x3x256xf32>
    tpu.vector_store %arg2[%c7, %c0_19, %c0_20], %39 {strides = array<i32>} : memref<9x3x256xf32, #tpu.memory_space<vmem>>, vector<1x3x256xf32>,
    %40 = math.cos %35 : vector<3x256xf32>
    %c8 = arith.constant 8 : index
    %c0_21 = arith.constant 0 : index
    %c0_22 = arith.constant 0 : index
    %41 = vector.load %arg2[%c8, %c0_21, %c0_22] : memref<9x3x256xf32, #tpu.memory_space<vmem>>, vector<1x3x256xf32>
    %42 = vector.shape_cast %41 : vector<1x3x256xf32> to vector<3x256xf32>
    %43 = vector.shape_cast %40 : vector<3x256xf32> to vector<1x3x256xf32>
    tpu.vector_store %arg2[%c8, %c0_21, %c0_22], %43 {strides = array<i32>} : memref<9x3x256xf32, #tpu.memory_space<vmem>>, vector<1x3x256xf32>,
    return
  }
  func.func @transform_0(%arg0: i32) -> (i32, i32) {
    %c0_i32 = arith.constant 0 : i32
    %c0_i32_0 = arith.constant 0 : i32
    return %c0_i32, %arg0 : i32, i32
  }
  func.func @transform_1(%arg0: i32) -> (i32, i32, i32) {
    %c0_i32 = arith.constant 0 : i32
    %c0_i32_0 = arith.constant 0 : i32
    %c0_i32_1 = arith.constant 0 : i32
    return %c0_i32, %c0_i32_0, %arg0 : i32, i32, i32
  }
}

</mosaic_0001>

<llo_original>
// kernel: tpu_custom_call.1
$region0: #{tpu_custom_call.1}
  #allocation0 [shape = 'u32[]', space=smem, size = 0x4, offset = 0x4, fixed_abs, tag = 'smem constant byte address 0x4 - core index']
  #allocation1 [shape = 'u32[144,128]{1,0:T(1,128)}', space=vmem, size = 0x12000, scoped, tag = 'internal scratch']
  %s0 = inlined_call_operand.hbm [shape: f32[3,1000], index: 0, kind: input, shape index: {}]
  %s1 = inlined_call_operand.hbm [shape: f32[9,3,1000], index: 1, kind: output, shape index: {}]
  %s2 = sld [smem:[#allocation0]]
  $region41: #{tpu_custom_call.1} parent=0
    _
  %s4 = ssub.s32 1, %s2
  %s5 = scalar_select 0, %s4, %s2
  $region1: #{tpu_custom_call.1} parent=0
    #allocation2 [shape = 'u8[8192]{0}', space=vmem, size = 0x2000, scoped, tag = 'input window, operand 0']
    #allocation3 [shape = 's32[2]{0}', space=sflag, size = 0x8, scoped, tag = 'scoped memory for tpu_custom_call.1']
    #allocation4 [shape = 's32[2]{0}', space=sflag, size = 0x8, scoped, tag = 'scoped memory for tpu_custom_call.1']
    #allocation5 [shape = 'u8[73728]{0}', space=vmem, size = 0x12000, scoped, tag = 'output window, operand 0']
    %6 = vsyncpa [#allocation3], 0
    %s7 = scalar_lea.sflag [#allocation3], 1
    %8 = vsyncpa %s7, 0
    %9 = vsyncpa [#allocation4], 0
    %s10 = scalar_lea.sflag [#allocation4], 1
    %11 = vsyncpa %s10, 0
    loop: start=0, step=1, limit=6
    $region2: #{tpu_custom_call.1} parent=1 // loop_pre_header
      _
    $region3: #{tpu_custom_call.1} parent=1 // loop_header
      %s13 = sphi 0, %s17
      %p14 = scmp.ge.s32.totalorder %s13, 6
      %s23 = sphi 0, %s25
      %s26 = sphi 0, %s23
      %s27 = sphi 0, %s26
      %s43 = sphi 0, %s27
      %s49 = sphi 0, %s51
      %s52 = sphi 0, %s49
      %s53 = sphi 0, %s52
      %s69 = sphi 0, %s53
    $region4: #{tpu_custom_call.1} parent=1 // loop_header_branch
      %16 = sbr.rel (%p14) target = $region8
    $region5: #{tpu_custom_call.1} parent=1 // loop_body
      %s18 = ssub.s32 %s13, 1
      %s19 = ssub.s32 %s13, 2
      %s20 = sadd.s32 %s13, 1
      %s21 = ssub.s32 %s13, %s20
      %p22 = scmp.eq.s32.totalorder %s21, 0
      %s24 = sadd.s32 %s23, 1
      %s25 = scalar_select %p22, %s23, %s24
      %p28 = pneg %p22
      %p29 = scmp.eq.s32.totalorder %s13, 3
      %p30 = por %p28, %p29
      %p31 = scmp.ne.s32.totalorder %s23, %s26
      %p32 = scmp.eq.s32.totalorder %s13, 0
      %p33 = por %p31, %p32
      %p34 = scmp.ne.s32.totalorder %s23, %s26
      %p35 = scmp.eq.s32.totalorder %s18, 3
      %p36 = por %p34, %p35
      %p37 = scmp.ne.s32.totalorder %s26, %s27
      %p38 = scmp.eq.s32.totalorder %s18, 0
      %p39 = por %p37, %p38
      %p40 = scmp.ne.s32.totalorder %s26, %s27
      %p41 = scmp.eq.s32.totalorder %s19, 3
      %p42 = por %p40, %p41
      %p44 = scmp.ne.s32.totalorder %s27, %s43
      %p45 = scmp.eq.s32.totalorder %s19, 0
      %p46 = por %p44, %p45
      %s47 = ssub.s32 %s13, %s20
      %p48 = scmp.eq.s32.totalorder %s47, 0
      %s50 = sadd.s32 %s49, 1
      %s51 = scalar_select %p48, %s49, %s50
      %p54 = pneg %p48
      %p55 = scmp.eq.s32.totalorder %s13, 3
      %p56 = por %p54, %p55
      %p57 = scmp.ne.s32.totalorder %s49, %s52
      %p58 = scmp.eq.s32.totalorder %s13, 0
      %p59 = por %p57, %p58
      %p60 = scmp.ne.s32.totalorder %s49, %s52
      %p61 = scmp.eq.s32.totalorder %s18, 3
      %p62 = por %p60, %p61
      %p63 = scmp.ne.s32.totalorder %s52, %s53
      %p64 = scmp.eq.s32.totalorder %s18, 0
      %p65 = por %p63, %p64
      %p66 = scmp.ne.s32.totalorder %s52, %s53
      %p67 = scmp.eq.s32.totalorder %s19, 3
      %p68 = por %p66, %p67
      %p70 = scmp.ne.s32.totalorder %s53, %s69
      %p71 = scmp.eq.s32.totalorder %s19, 0
      %p72 = por %p70, %p71
      %p73 = scmp.le.s32.totalorder 1, %s13
      %p74 = scmp.lt.s32.totalorder %s13, 5
      %p75 = pnand %p73, %p74
      %p76 = pneg %p75
      // Predicated region
      $region9: #{tpu_custom_call.1} parent=5 // pred_check
        _
      $region10: #{tpu_custom_call.1} parent=5 // pred_check_branch
        %78 = sbr.rel (%p75) target = $region12
      $region11: #{tpu_custom_call.1} parent=5 // pred_region
        %s79 = ssub.s32 %s13, 1
      $region12: #{tpu_custom_call.1} parent=5 // pred_fallthru
        _
      %p80 = scmp.lt.s32.totalorder %s13, 4
      // Predicated region
      $region13: #{tpu_custom_call.1} parent=5 // pred_check
        %p81 = pneg %p80
      $region14: #{tpu_custom_call.1} parent=5 // pred_check_branch
        %83 = sbr.rel (%p81) target = $region16
      $region15: #{tpu_custom_call.1} parent=5 // pred_region
        // Predicated region
        $region17: #{tpu_custom_call.1} parent=15 // pred_check
          %p84 = pneg %p33
        $region18: #{tpu_custom_call.1} parent=15 // pred_check_branch
          %86 = sbr.rel (%p84) target = $region20
        $region19: #{tpu_custom_call.1} parent=15 // pred_region
          %s87 = sand.u32 %s23, 1
          %s88 = scalar_lea.sflag [#allocation3], %s87
          %s89 = sand.u32 %s23, 1
          %s90 = smul.addr %s89, 8
          %s91 = scalar_lea.vmem [#allocation2], %s90
          %s92 = smul.u32 2, %s13
          %s94 = ssub.s32 128, 128
          %95 = vsyncadd %s88, %s94
          %s96 = smul.addr %s92, 64
          %s97 = scalar_lea.hbm %s0, %s96
          %s99 = sshll.u32 %s91, 4
          %s100 = int_to_ptr.vmem [resolvable:$true] %s99
          %102 = dma.hbm_to_vmem [thread:$0]  %s97, 128, %s100, %s88
        $region20: #{tpu_custom_call.1} parent=15 // pred_fallthru
          _
      $region16: #{tpu_custom_call.1} parent=5 // pred_fallthru
        _
      %p103 = scmp.le.s32.totalorder 1, %s13
      %p104 = scmp.lt.s32.totalorder %s13, 5
      %p105 = pnand %p103, %p104
      %p106 = pneg %p105
      // Predicated region
      $region21: #{tpu_custom_call.1} parent=5 // pred_check
        _
      $region22: #{tpu_custom_call.1} parent=5 // pred_check_branch
        %108 = sbr.rel (%p105) target = $region24
      $region23: #{tpu_custom_call.1} parent=5 // pred_region
        %s109 = ssub.s32 %s13, 1
        %s110 = sand.u32 %s26, 1
        %s111 = scalar_lea.sflag [#allocation3], %s110
        %s112 = sand.u32 %s26, 1
        %s113 = smul.addr %s112, 8
        %s114 = scalar_lea.vmem [#allocation2], %s113
        // Predicated region
        $region25: #{tpu_custom_call.1} parent=23 // pred_check
          %p115 = pneg %p39
        $region26: #{tpu_custom_call.1} parent=23 // pred_check_branch
          %117 = sbr.rel (%p115) target = $region28
        $region27: #{tpu_custom_call.1} parent=23 // pred_region
          %118 = dma.done %s111, 128
        $region28: #{tpu_custom_call.1} parent=23 // pred_fallthru
          _
        %s119 = sand.u32 %s26, 1
        %s120 = scalar_lea.sflag [#allocation3], %s119
        %s121 = sand.u32 %s26, 1
        %s122 = smul.addr %s121, 8
        %s123 = scalar_lea.vmem [#allocation2], %s122
        %p124 = pneg %p39
        %p125 = pneg %p36
        %p126 = pneg %p65
        %p127 = pneg %p62
        %s128 = sand.u32 %s52, 1
        %s129 = scalar_lea.sflag [#allocation4], %s128
        %s130 = sand.u32 %s52, 1
        %s131 = smul.addr %s130, 72
        %s132 = scalar_lea.vmem [#allocation5], %s131
        %s133 = smul.u32 2, %s18
        %s134 = smul.u32 2, %s18
        %v135 = vld [vmem:[%s114] sm:$0x77]
        %136 = vst [vmem:[%s132] sm:$0x77] %v135
        %v137 = vand.u32 2147483647, %v135
        %vm138 = vcmp.le.f32.partialorder %v137, 0.7853982
        %vm139 = vcmp.lt.s32.totalorder %v135, 0
        %v140 = vand.u32 %v135, 2139095040
        %v141 = vshrl.u32 %v140, 23
        %v142 = vsub.s32 %v141, 127
        %v143 = vand.u32 2147483647, %v135
        %v144 = vand.u32 %v143, 8388607
        %v145 = vor.u32 %v144, 8388608
        %v146 = vsub.s32 0, %v145
        %v147 = vadd.s32 %v142, 1
        %vm148 = vcmp.gt.s32.totalorder %v147, 0
        %v149 = vsel %vm148, %v147, 0
        %v150 = vshrl.u32 %v149, 5
        %v151 = vand.u32 %v149, 31
        %v152 = vsub.s32 32, %v151
        %v153 = vshrl.u32 683565275, %v152
        %v154 = vshll.u32 683565275, %v151
        %v155 = vshrl.u32 2475754826, %v152
        %v156 = vor.u32 %v154, %v155
        %v157 = vshll.u32 2475754826, %v151
        %v158 = vshrl.u32 2131351028, %v152
        %v159 = vor.u32 %v157, %v158
        %v160 = vshll.u32 2131351028, %v151
        %v161 = vshrl.u32 2102212464, %v152
        %v162 = vor.u32 %v160, %v161
        %v163 = vshll.u32 2102212464, %v151
        %v164 = vshrl.u32 920167782, %v152
        %v165 = vor.u32 %v163, %v164
        %v166 = vshll.u32 920167782, %v151
        %v167 = vshrl.u32 1326507024, %v152
        %v168 = vor.u32 %v166, %v167
        %vm169 = vcmp.lt.s32.totalorder %v150, 1
        %vm170 = vcmp.lt.s32.totalorder %v150, 2
        %vm171 = vcmp.lt.s32.totalorder %v150, 3
        %vm172 = vcmp.lt.s32.totalorder %v150, 4
        %v173 = vsel %vm169, %v153, %v156
        %v174 = vsel %vm172, %v162, 2102212464
        %v175 = vsel %vm171, %v159, %v174
        %v176 = vsel %vm170, %v173, %v175
        %v177 = vsel %vm169, %v156, %v159
        %v178 = vsel %vm172, %v165, 920167782
        %v179 = vsel %vm171, %v162, %v178
        %v180 = vsel %vm170, %v177, %v179
        %v181 = vsel %vm169, %v159, %v162
        %v182 = vsel %vm172, %v168, 1326507024
        %v183 = vsel %vm171, %v165, %v182
        %v184 = vsel %vm170, %v181, %v183
        %v185 = vshll.u32 %v145, 8
        %v186 = vmul.u32.u64.compose %v185, %v184
        %v187 = vextract.low.u32 %v186
        %v188 = vextract.high.u32 %v186
        %v189 = vmul.u32.u64.compose %v185, %v180
        %v190 = vextract.low.u32 %v189
        %v191 = vextract.high.u32 %v189
        %v192 = vmul.u32 %v185, %v176
        %v193 = vadd.s32 %v188, %v190
        %vm194 = vc.u32 %v188, %v190
        %v195 = vadd.s32 %v191, 1
        %v196 = vsel %vm194, %v195, %v191
        %v197 = vadd.s32 %v192, %v196
        %v198 = vadd.s32 %v197, 536870912
        %v199 = vshrl.u32 %v198, 30
        %v200 = vshll.u32 %v199, 30
        %v201 = vsub.s32 %v197, %v200
        %vm202 = vcmp.lt.s32.totalorder %v201, 0
        %v203 = vsub.s32 0, %v201
        %v204 = vsel %vm202, %v203, %v201
        %v205 = vclz %v204
        %v206 = vsub.s32 %v205, 2
        %vm207 = vcmp.gt.s32.totalorder 0, %v206
        %v208 = vsel %vm207, 0, %v206
        %v209 = vsub.s32 32, %v208
        %v210 = vshll.u32 %v201, %v208
        %v211 = vshrl.u32 %v193, %v209
        %v212 = vor.u32 %v210, %v211
        %v213 = vsub.s32 4294967266, %v208
        %v214 = vadd.s32 %v213, 127
        %v215 = vshll.u32 %v214, 23
        %v216 = vor.u32 4788187, %v215
        %v217 = vand.u32 2147483647, %v216
        %v219 = vcvt.s32.f32 %v212
        %v220 = vmul.f32 %v219, %v217
        %v221 = vxor.u32 %v220, 2147483648
        %v222 = vsel %vm139, %v221, %v220
        %v223 = vsub.s32 4, %v199
        %v224 = vsel %vm139, %v223, %v199
        %v225 = vsel %vm138, %v135, %v222
        %v226 = vsel %vm138, 0, %v224
        %v227 = vcosq.f32.pop %v225
        %v228 = vsinq.f32.pop %v225
        %vm229 = vweird.f32 %v135
        %v230 = vadd.s32 %v226, 3
        %v231 = vand.u32 %v230, 3
        %vm232 = vcmp.lt.s32.totalorder %v231, 2
        %vm233 = vcmp.eq.s32.totalorder %v231, 0
        %v234 = vxor.u32 %v228, 2147483648
        %v235 = vsel %vm233, %v227, %v234
        %vm236 = vcmp.eq.s32.totalorder %v231, 2
        %v237 = vxor.u32 %v227, 2147483648
        %v238 = vsel %vm236, %v237, %v228
        %v239 = vsel %vm232, %v235, %v238
        %v240 = vsel %vm229, nan, %v239
        %s241 = scalar_lea.vmem %s132, 8 [#allocation5]
        %242 = vst [vmem:[%s241] sm:$0x77] %v240
        %v243 = vand.u32 2147483647, %v135
        %vm244 = vcmp.le.f32.partialorder %v243, 0.7853982
        %vm245 = vcmp.lt.s32.totalorder %v135, 0
        %v246 = vand.u32 %v135, 2139095040
        %v247 = vshrl.u32 %v246, 23
        %v248 = vsub.s32 %v247, 127
        %v249 = vand.u32 2147483647, %v135
        %v250 = vand.u32 %v249, 8388607
        %v251 = vor.u32 %v250, 8388608
        %v252 = vsub.s32 0, %v251
        %v253 = vadd.s32 %v248, 1
        %vm254 = vcmp.gt.s32.totalorder %v253, 0
        %v255 = vsel %vm254, %v253, 0
        %v256 = vshrl.u32 %v255, 5
        %v257 = vand.u32 %v255, 31
        %v258 = vsub.s32 32, %v257
        %v259 = vshrl.u32 683565275, %v258
        %v260 = vshll.u32 683565275, %v257
        %v261 = vshrl.u32 2475754826, %v258
        %v262 = vor.u32 %v260, %v261
        %v263 = vshll.u32 2475754826, %v257
        %v264 = vshrl.u32 2131351028, %v258
        %v265 = vor.u32 %v263, %v264
        %v266 = vshll.u32 2131351028, %v257
        %v267 = vshrl.u32 2102212464, %v258
        %v268 = vor.u32 %v266, %v267
        %v269 = vshll.u32 2102212464, %v257
        %v270 = vshrl.u32 920167782, %v258
        %v271 = vor.u32 %v269, %v270
        %v272 = vshll.u32 920167782, %v257
        %v273 = vshrl.u32 1326507024, %v258
        %v274 = vor.u32 %v272, %v273
        %vm275 = vcmp.lt.s32.totalorder %v256, 1
        %vm276 = vcmp.lt.s32.totalorder %v256, 2
        %vm277 = vcmp.lt.s32.totalorder %v256, 3
        %vm278 = vcmp.lt.s32.totalorder %v256, 4
        %v279 = vsel %vm275, %v259, %v262
        %v280 = vsel %vm278, %v268, 2102212464
        %v281 = vsel %vm277, %v265, %v280
        %v282 = vsel %vm276, %v279, %v281
        %v283 = vsel %vm275, %v262, %v265
        %v284 = vsel %vm278, %v271, 920167782
        %v285 = vsel %vm277, %v268, %v284
        %v286 = vsel %vm276, %v283, %v285
        %v287 = vsel %vm275, %v265, %v268
        %v288 = vsel %vm278, %v274, 1326507024
        %v289 = vsel %vm277, %v271, %v288
        %v290 = vsel %vm276, %v287, %v289
        %v291 = vshll.u32 %v251, 8
        %v292 = vmul.u32.u64.compose %v291, %v290
        %v293 = vextract.low.u32 %v292
        %v294 = vextract.high.u32 %v292
        %v295 = vmul.u32.u64.compose %v291, %v286
        %v296 = vextract.low.u32 %v295
        %v297 = vextract.high.u32 %v295
        %v298 = vmul.u32 %v291, %v282
        %v299 = vadd.s32 %v294, %v296
        %vm300 = vc.u32 %v294, %v296
        %v301 = vadd.s32 %v297, 1
        %v302 = vsel %vm300, %v301, %v297
        %v303 = vadd.s32 %v298, %v302
        %v304 = vadd.s32 %v303, 536870912
        %v305 = vshrl.u32 %v304, 30
        %v306 = vshll.u32 %v305, 30
        %v307 = vsub.s32 %v303, %v306
        %vm308 = vcmp.lt.s32.totalorder %v307, 0
        %v309 = vsub.s32 0, %v307
        %v310 = vsel %vm308, %v309, %v307
        %v311 = vclz %v310
        %v312 = vsub.s32 %v311, 2
        %vm313 = vcmp.gt.s32.totalorder 0, %v312
        %v314 = vsel %vm313, 0, %v312
        %v315 = vsub.s32 32, %v314
        %v316 = vshll.u32 %v307, %v314
        %v317 = vshrl.u32 %v299, %v315
        %v318 = vor.u32 %v316, %v317
        %v319 = vsub.s32 4294967266, %v314
        %v320 = vadd.s32 %v319, 127
        %v321 = vshll.u32 %v320, 23
        %v322 = vor.u32 4788187, %v321
        %v323 = vand.u32 2147483647, %v322
        %v325 = vcvt.s32.f32 %v318
        %v326 = vmul.f32 %v325, %v323
        %v327 = vxor.u32 %v326, 2147483648
        %v328 = vsel %vm245, %v327, %v326
        %v329 = vsub.s32 4, %v305
        %v330 = vsel %vm245, %v329, %v305
        %v331 = vsel %vm244, %v135, %v328
        %v332 = vsel %vm244, 0, %v330
        %v333 = vcosq.f32.pop %v331
        %v334 = vsinq.f32.pop %v331
        %vm335 = vweird.f32 %v135
        %v336 = vand.u32 %v332, 3
        %vm337 = vcmp.lt.s32.totalorder %v336, 2
        %vm338 = vcmp.eq.s32.totalorder %v336, 0
        %v339 = vxor.u32 %v334, 2147483648
        %v340 = vsel %vm338, %v333, %v339
        %vm341 = vcmp.eq.s32.totalorder %v336, 2
        %v342 = vxor.u32 %v333, 2147483648
        %v343 = vsel %vm341, %v342, %v334
        %v344 = vsel %vm337, %v340, %v343
        %v345 = vsel %vm335, nan, %v344
        %s346 = scalar_lea.vmem %s132, 16 [#allocation5]
        %347 = vst [vmem:[%s346] sm:$0x77] %v345
        %v348 = vmul.f32 %v135, 3.3333333
        %v349 = vand.u32 2147483647, %v348
        %vm350 = vcmp.le.f32.partialorder %v349, 0.7853982
        %vm351 = vcmp.lt.s32.totalorder %v348, 0
        %v352 = vand.u32 %v348, 2139095040
        %v353 = vshrl.u32 %v352, 23
        %v354 = vsub.s32 %v353, 127
        %v355 = vand.u32 2147483647, %v348
        %v356 = vand.u32 %v355, 8388607
        %v357 = vor.u32 %v356, 8388608
        %v358 = vsub.s32 0, %v357
        %v359 = vadd.s32 %v354, 1
        %vm360 = vcmp.gt.s32.totalorder %v359, 0
        %v361 = vsel %vm360, %v359, 0
        %v362 = vshrl.u32 %v361, 5
        %v363 = vand.u32 %v361, 31
        %v364 = vsub.s32 32, %v363
        %v365 = vshrl.u32 683565275, %v364
        %v366 = vshll.u32 683565275, %v363
        %v367 = vshrl.u32 2475754826, %v364
        %v368 = vor.u32 %v366, %v367
        %v369 = vshll.u32 2475754826, %v363
        %v370 = vshrl.u32 2131351028, %v364
        %v371 = vor.u32 %v369, %v370
        %v372 = vshll.u32 2131351028, %v363
        %v373 = vshrl.u32 2102212464, %v364
        %v374 = vor.u32 %v372, %v373
        %v375 = vshll.u32 2102212464, %v363
        %v376 = vshrl.u32 920167782, %v364
        %v377 = vor.u32 %v375, %v376
        %v378 = vshll.u32 920167782, %v363
        %v379 = vshrl.u32 1326507024, %v364
        %v380 = vor.u32 %v378, %v379
        %vm381 = vcmp.lt.s32.totalorder %v362, 1
        %vm382 = vcmp.lt.s32.totalorder %v362, 2
        %vm383 = vcmp.lt.s32.totalorder %v362, 3
        %vm384 = vcmp.lt.s32.totalorder %v362, 4
        %v385 = vsel %vm381, %v365, %v368
        %v386 = vsel %vm384, %v374, 2102212464
        %v387 = vsel %vm383, %v371, %v386
        %v388 = vsel %vm382, %v385, %v387
        %v389 = vsel %vm381, %v368, %v371
        %v390 = vsel %vm384, %v377, 920167782
        %v391 = vsel %vm383, %v374, %v390
        %v392 = vsel %vm382, %v389, %v391
        %v393 = vsel %vm381, %v371, %v374
        %v394 = vsel %vm384, %v380, 1326507024
        %v395 = vsel %vm383, %v377, %v394
        %v396 = vsel %vm382, %v393, %v395
        %v397 = vshll.u32 %v357, 8
        %v398 = vmul.u32.u64.compose %v397, %v396
        %v399 = vextract.low.u32 %v398
        %v400 = vextract.high.u32 %v398
        %v401 = vmul.u32.u64.compose %v397, %v392
        %v402 = vextract.low.u32 %v401
        %v403 = vextract.high.u32 %v401
        %v404 = vmul.u32 %v397, %v388
        %v405 = vadd.s32 %v400, %v402
        %vm406 = vc.u32 %v400, %v402
        %v407 = vadd.s32 %v403, 1
        %v408 = vsel %vm406, %v407, %v403
        %v409 = vadd.s32 %v404, %v408
        %v410 = vadd.s32 %v409, 536870912
        %v411 = vshrl.u32 %v410, 30
        %v412 = vshll.u32 %v411, 30
        %v413 = vsub.s32 %v409, %v412
        %vm414 = vcmp.lt.s32.totalorder %v413, 0
        %v415 = vsub.s32 0, %v413
        %v416 = vsel %vm414, %v415, %v413
        %v417 = vclz %v416
        %v418 = vsub.s32 %v417, 2
        %vm419 = vcmp.gt.s32.totalorder 0, %v418
        %v420 = vsel %vm419, 0, %v418
        %v421 = vsub.s32 32, %v420
        %v422 = vshll.u32 %v413, %v420
        %v423 = vshrl.u32 %v405, %v421
        %v424 = vor.u32 %v422, %v423
        %v425 = vsub.s32 4294967266, %v420
        %v426 = vadd.s32 %v425, 127
        %v427 = vshll.u32 %v426, 23
        %v428 = vor.u32 4788187, %v427
        %v429 = vand.u32 2147483647, %v428
        %v431 = vcvt.s32.f32 %v424
        %v432 = vmul.f32 %v431, %v429
        %v433 = vxor.u32 %v432, 2147483648
        %v434 = vsel %vm351, %v433, %v432
        %v435 = vsub.s32 4, %v411
        %v436 = vsel %vm351, %v435, %v411
        %v437 = vsel %vm350, %v348, %v434
        %v438 = vsel %vm350, 0, %v436
        %v439 = vcosq.f32.pop %v437
        %v440 = vsinq.f32.pop %v437
        %vm441 = vweird.f32 %v348
        %v442 = vadd.s32 %v438, 3
        %v443 = vand.u32 %v442, 3
        %vm444 = vcmp.lt.s32.totalorder %v443, 2
        %vm445 = vcmp.eq.s32.totalorder %v443, 0
        %v446 = vxor.u32 %v440, 2147483648
        %v447 = vsel %vm445, %v439, %v446
        %vm448 = vcmp.eq.s32.totalorder %v443, 2
        %v449 = vxor.u32 %v439, 2147483648
        %v450 = vsel %vm448, %v449, %v440
        %v451 = vsel %vm444, %v447, %v450
        %v452 = vsel %vm441, nan, %v451
        %s453 = scalar_lea.vmem %s132, 24 [#allocation5]
        %454 = vst [vmem:[%s453] sm:$0x77] %v452
        %v455 = vand.u32 2147483647, %v348
        %vm456 = vcmp.le.f32.partialorder %v455, 0.7853982
        %vm457 = vcmp.lt.s32.totalorder %v348, 0
        %v458 = vand.u32 %v348, 2139095040
        %v459 = vshrl.u32 %v458, 23
        %v460 = vsub.s32 %v459, 127
        %v461 = vand.u32 2147483647, %v348
        %v462 = vand.u32 %v461, 8388607
        %v463 = vor.u32 %v462, 8388608
        %v464 = vsub.s32 0, %v463
        %v465 = vadd.s32 %v460, 1
        %vm466 = vcmp.gt.s32.totalorder %v465, 0
        %v467 = vsel %vm466, %v465, 0
        %v468 = vshrl.u32 %v467, 5
        %v469 = vand.u32 %v467, 31
        %v470 = vsub.s32 32, %v469
        %v471 = vshrl.u32 683565275, %v470
        %v472 = vshll.u32 683565275, %v469
        %v473 = vshrl.u32 2475754826, %v470
        %v474 = vor.u32 %v472, %v473
        %v475 = vshll.u32 2475754826, %v469
        %v476 = vshrl.u32 2131351028, %v470
        %v477 = vor.u32 %v475, %v476
        %v478 = vshll.u32 2131351028, %v469
        %v479 = vshrl.u32 2102212464, %v470
        %v480 = vor.u32 %v478, %v479
        %v481 = vshll.u32 2102212464, %v469
        %v482 = vshrl.u32 920167782, %v470
        %v483 = vor.u32 %v481, %v482
        %v484 = vshll.u32 920167782, %v469
        %v485 = vshrl.u32 1326507024, %v470
        %v486 = vor.u32 %v484, %v485
        %vm487 = vcmp.lt.s32.totalorder %v468, 1
        %vm488 = vcmp.lt.s32.totalorder %v468, 2
        %vm489 = vcmp.lt.s32.totalorder %v468, 3
        %vm490 = vcmp.lt.s32.totalorder %v468, 4
        %v491 = vsel %vm487, %v471, %v474
        %v492 = vsel %vm490, %v480, 2102212464
        %v493 = vsel %vm489, %v477, %v492
        %v494 = vsel %vm488, %v491, %v493
        %v495 = vsel %vm487, %v474, %v477
        %v496 = vsel %vm490, %v483, 920167782
        %v497 = vsel %vm489, %v480, %v496
        %v498 = vsel %vm488, %v495, %v497
        %v499 = vsel %vm487, %v477, %v480
        %v500 = vsel %vm490, %v486, 1326507024
        %v501 = vsel %vm489, %v483, %v500
        %v502 = vsel %vm488, %v499, %v501
        %v503 = vshll.u32 %v463, 8
        %v504 = vmul.u32.u64.compose %v503, %v502
        %v505 = vextract.low.u32 %v504
        %v506 = vextract.high.u32 %v504
        %v507 = vmul.u32.u64.compose %v503, %v498
        %v508 = vextract.low.u32 %v507
        %v509 = vextract.high.u32 %v507
        %v510 = vmul.u32 %v503, %v494
        %v511 = vadd.s32 %v506, %v508
        %vm512 = vc.u32 %v506, %v508
        %v513 = vadd.s32 %v509, 1
        %v514 = vsel %vm512, %v513, %v509
        %v515 = vadd.s32 %v510, %v514
        %v516 = vadd.s32 %v515, 536870912
        %v517 = vshrl.u32 %v516, 30
        %v518 = vshll.u32 %v517, 30
        %v519 = vsub.s32 %v515, %v518
        %vm520 = vcmp.lt.s32.totalorder %v519, 0
        %v521 = vsub.s32 0, %v519
        %v522 = vsel %vm520, %v521, %v519
        %v523 = vclz %v522
        %v524 = vsub.s32 %v523, 2
        %vm525 = vcmp.gt.s32.totalorder 0, %v524
        %v526 = vsel %vm525, 0, %v524
        %v527 = vsub.s32 32, %v526
        %v528 = vshll.u32 %v519, %v526
        %v529 = vshrl.u32 %v511, %v527
        %v530 = vor.u32 %v528, %v529
        %v531 = vsub.s32 4294967266, %v526
        %v532 = vadd.s32 %v531, 127
        %v533 = vshll.u32 %v532, 23
        %v534 = vor.u32 4788187, %v533
        %v535 = vand.u32 2147483647, %v534
        %v537 = vcvt.s32.f32 %v530
        %v538 = vmul.f32 %v537, %v535
        %v539 = vxor.u32 %v538, 2147483648
        %v540 = vsel %vm457, %v539, %v538
        %v541 = vsub.s32 4, %v517
        %v542 = vsel %vm457, %v541, %v517
        %v543 = vsel %vm456, %v348, %v540
        %v544 = vsel %vm456, 0, %v542
        %v545 = vcosq.f32.pop %v543
        %v546 = vsinq.f32.pop %v543
        %vm547 = vweird.f32 %v348
        %v548 = vand.u32 %v544, 3
        %vm549 = vcmp.lt.s32.totalorder %v548, 2
        %vm550 = vcmp.eq.s32.totalorder %v548, 0
        %v551 = vxor.u32 %v546, 2147483648
        %v552 = vsel %vm550, %v545, %v551
        %vm553 = vcmp.eq.s32.totalorder %v548, 2
        %v554 = vxor.u32 %v545, 2147483648
        %v555 = vsel %vm553, %v554, %v546
        %v556 = vsel %vm549, %v552, %v555
        %v557 = vsel %vm547, nan, %v556
        %s558 = scalar_lea.vmem %s132, 32 [#allocation5]
        %559 = vst [vmem:[%s558] sm:$0x77] %v557
        %v560 = vmul.f32 %v135, 5.6666665
        %v561 = vand.u32 2147483647, %v560
        %vm562 = vcmp.le.f32.partialorder %v561, 0.7853982
        %vm563 = vcmp.lt.s32.totalorder %v560, 0
        %v564 = vand.u32 %v560, 2139095040
        %v565 = vshrl.u32 %v564, 23
        %v566 = vsub.s32 %v565, 127
        %v567 = vand.u32 2147483647, %v560
        %v568 = vand.u32 %v567, 8388607
        %v569 = vor.u32 %v568, 8388608
        %v570 = vsub.s32 0, %v569
        %v571 = vadd.s32 %v566, 1
        %vm572 = vcmp.gt.s32.totalorder %v571, 0
        %v573 = vsel %vm572, %v571, 0
        %v574 = vshrl.u32 %v573, 5
        %v575 = vand.u32 %v573, 31
        %v576 = vsub.s32 32, %v575
        %v577 = vshrl.u32 683565275, %v576
        %v578 = vshll.u32 683565275, %v575
        %v579 = vshrl.u32 2475754826, %v576
        %v580 = vor.u32 %v578, %v579
        %v581 = vshll.u32 2475754826, %v575
        %v582 = vshrl.u32 2131351028, %v576
        %v583 = vor.u32 %v581, %v582
        %v584 = vshll.u32 2131351028, %v575
        %v585 = vshrl.u32 2102212464, %v576
        %v586 = vor.u32 %v584, %v585
        %v587 = vshll.u32 2102212464, %v575
        %v588 = vshrl.u32 920167782, %v576
        %v589 = vor.u32 %v587, %v588
        %v590 = vshll.u32 920167782, %v575
        %v591 = vshrl.u32 1326507024, %v576
        %v592 = vor.u32 %v590, %v591
        %vm593 = vcmp.lt.s32.totalorder %v574, 1
        %vm594 = vcmp.lt.s32.totalorder %v574, 2
        %vm595 = vcmp.lt.s32.totalorder %v574, 3
        %vm596 = vcmp.lt.s32.totalorder %v574, 4
        %v597 = vsel %vm593, %v577, %v580
        %v598 = vsel %vm596, %v586, 2102212464
        %v599 = vsel %vm595, %v583, %v598
        %v600 = vsel %vm594, %v597, %v599
        %v601 = vsel %vm593, %v580, %v583
        %v602 = vsel %vm596, %v589, 920167782
        %v603 = vsel %vm595, %v586, %v602
        %v604 = vsel %vm594, %v601, %v603
        %v605 = vsel %vm593, %v583, %v586
        %v606 = vsel %vm596, %v592, 1326507024
        %v607 = vsel %vm595, %v589, %v606
        %v608 = vsel %vm594, %v605, %v607
        %v609 = vshll.u32 %v569, 8
        %v610 = vmul.u32.u64.compose %v609, %v608
        %v611 = vextract.low.u32 %v610
        %v612 = vextract.high.u32 %v610
        %v613 = vmul.u32.u64.compose %v609, %v604
        %v614 = vextract.low.u32 %v613
        %v615 = vextract.high.u32 %v613
        %v616 = vmul.u32 %v609, %v600
        %v617 = vadd.s32 %v612, %v614
        %vm618 = vc.u32 %v612, %v614
        %v619 = vadd.s32 %v615, 1
        %v620 = vsel %vm618, %v619, %v615
        %v621 = vadd.s32 %v616, %v620
        %v622 = vadd.s32 %v621, 536870912
        %v623 = vshrl.u32 %v622, 30
        %v624 = vshll.u32 %v623, 30
        %v625 = vsub.s32 %v621, %v624
        %vm626 = vcmp.lt.s32.totalorder %v625, 0
        %v627 = vsub.s32 0, %v625
        %v628 = vsel %vm626, %v627, %v625
        %v629 = vclz %v628
        %v630 = vsub.s32 %v629, 2
        %vm631 = vcmp.gt.s32.totalorder 0, %v630
        %v632 = vsel %vm631, 0, %v630
        %v633 = vsub.s32 32, %v632
        %v634 = vshll.u32 %v625, %v632
        %v635 = vshrl.u32 %v617, %v633
        %v636 = vor.u32 %v634, %v635
        %v637 = vsub.s32 4294967266, %v632
        %v638 = vadd.s32 %v637, 127
        %v639 = vshll.u32 %v638, 23
        %v640 = vor.u32 4788187, %v639
        %v641 = vand.u32 2147483647, %v640
        %v643 = vcvt.s32.f32 %v636
        %v644 = vmul.f32 %v643, %v641
        %v645 = vxor.u32 %v644, 2147483648
        %v646 = vsel %vm563, %v645, %v644
        %v647 = vsub.s32 4, %v623
        %v648 = vsel %vm563, %v647, %v623
        %v649 = vsel %vm562, %v560, %v646
        %v650 = vsel %vm562, 0, %v648
        %v651 = vcosq.f32.pop %v649
        %v652 = vsinq.f32.pop %v649
        %vm653 = vweird.f32 %v560
        %v654 = vadd.s32 %v650, 3
        %v655 = vand.u32 %v654, 3
        %vm656 = vcmp.lt.s32.totalorder %v655, 2
        %vm657 = vcmp.eq.s32.totalorder %v655, 0
        %v658 = vxor.u32 %v652, 2147483648
        %v659 = vsel %vm657, %v651, %v658
        %vm660 = vcmp.eq.s32.totalorder %v655, 2
        %v661 = vxor.u32 %v651, 2147483648
        %v662 = vsel %vm660, %v661, %v652
        %v663 = vsel %vm656, %v659, %v662
        %v664 = vsel %vm653, nan, %v663
        %s665 = scalar_lea.vmem %s132, 40 [#allocation5]
        %666 = vst [vmem:[%s665] sm:$0x77] %v664
        %v667 = vand.u32 2147483647, %v560
        %vm668 = vcmp.le.f32.partialorder %v667, 0.7853982
        %vm669 = vcmp.lt.s32.totalorder %v560, 0
        %v670 = vand.u32 %v560, 2139095040
        %v671 = vshrl.u32 %v670, 23
        %v672 = vsub.s32 %v671, 127
        %v673 = vand.u32 2147483647, %v560
        %v674 = vand.u32 %v673, 8388607
        %v675 = vor.u32 %v674, 8388608
        %v676 = vsub.s32 0, %v675
        %v677 = vadd.s32 %v672, 1
        %vm678 = vcmp.gt.s32.totalorder %v677, 0
        %v679 = vsel %vm678, %v677, 0
        %v680 = vshrl.u32 %v679, 5
        %v681 = vand.u32 %v679, 31
        %v682 = vsub.s32 32, %v681
        %v683 = vshrl.u32 683565275, %v682
        %v684 = vshll.u32 683565275, %v681
        %v685 = vshrl.u32 2475754826, %v682
        %v686 = vor.u32 %v684, %v685
        %v687 = vshll.u32 2475754826, %v681
        %v688 = vshrl.u32 2131351028, %v682
        %v689 = vor.u32 %v687, %v688
        %v690 = vshll.u32 2131351028, %v681
        %v691 = vshrl.u32 2102212464, %v682
        %v692 = vor.u32 %v690, %v691
        %v693 = vshll.u32 2102212464, %v681
        %v694 = vshrl.u32 920167782, %v682
        %v695 = vor.u32 %v693, %v694
        %v696 = vshll.u32 920167782, %v681
        %v697 = vshrl.u32 1326507024, %v682
        %v698 = vor.u32 %v696, %v697
        %vm699 = vcmp.lt.s32.totalorder %v680, 1
        %vm700 = vcmp.lt.s32.totalorder %v680, 2
        %vm701 = vcmp.lt.s32.totalorder %v680, 3
        %vm702 = vcmp.lt.s32.totalorder %v680, 4
        %v703 = vsel %vm699, %v683, %v686
        %v704 = vsel %vm702, %v692, 2102212464
        %v705 = vsel %vm701, %v689, %v704
        %v706 = vsel %vm700, %v703, %v705
        %v707 = vsel %vm699, %v686, %v689
        %v708 = vsel %vm702, %v695, 920167782
        %v709 = vsel %vm701, %v692, %v708
        %v710 = vsel %vm700, %v707, %v709
        %v711 = vsel %vm699, %v689, %v692
        %v712 = vsel %vm702, %v698, 1326507024
        %v713 = vsel %vm701, %v695, %v712
        %v714 = vsel %vm700, %v711, %v713
        %v715 = vshll.u32 %v675, 8
        %v716 = vmul.u32.u64.compose %v715, %v714
        %v717 = vextract.low.u32 %v716
        %v718 = vextract.high.u32 %v716
        %v719 = vmul.u32.u64.compose %v715, %v710
        %v720 = vextract.low.u32 %v719
        %v721 = vextract.high.u32 %v719
        %v722 = vmul.u32 %v715, %v706
        %v723 = vadd.s32 %v718, %v720
        %vm724 = vc.u32 %v718, %v720
        %v725 = vadd.s32 %v721, 1
        %v726 = vsel %vm724, %v725, %v721
        %v727 = vadd.s32 %v722, %v726
        %v728 = vadd.s32 %v727, 536870912
        %v729 = vshrl.u32 %v728, 30
        %v730 = vshll.u32 %v729, 30
        %v731 = vsub.s32 %v727, %v730
        %vm732 = vcmp.lt.s32.totalorder %v731, 0
        %v733 = vsub.s32 0, %v731
        %v734 = vsel %vm732, %v733, %v731
        %v735 = vclz %v734
        %v736 = vsub.s32 %v735, 2
        %vm737 = vcmp.gt.s32.totalorder 0, %v736
        %v738 = vsel %vm737, 0, %v736
        %v739 = vsub.s32 32, %v738
        %v740 = vshll.u32 %v731, %v738
        %v741 = vshrl.u32 %v723, %v739
        %v742 = vor.u32 %v740, %v741
        %v743 = vsub.s32 4294967266, %v738
        %v744 = vadd.s32 %v743, 127
        %v745 = vshll.u32 %v744, 23
        %v746 = vor.u32 4788187, %v745
        %v747 = vand.u32 2147483647, %v746
        %v749 = vcvt.s32.f32 %v742
        %v750 = vmul.f32 %v749, %v747
        %v751 = vxor.u32 %v750, 2147483648
        %v752 = vsel %vm669, %v751, %v750
        %v753 = vsub.s32 4, %v729
        %v754 = vsel %vm669, %v753, %v729
        %v755 = vsel %vm668, %v560, %v752
        %v756 = vsel %vm668, 0, %v754
        %v757 = vcosq.f32.pop %v755
        %v758 = vsinq.f32.pop %v755
        %vm759 = vweird.f32 %v560
        %v760 = vand.u32 %v756, 3
        %vm761 = vcmp.lt.s32.totalorder %v760, 2
        %vm762 = vcmp.eq.s32.totalorder %v760, 0
        %v763 = vxor.u32 %v758, 2147483648
        %v764 = vsel %vm762, %v757, %v763
        %vm765 = vcmp.eq.s32.totalorder %v760, 2
        %v766 = vxor.u32 %v757, 2147483648
        %v767 = vsel %vm765, %v766, %v758
        %v768 = vsel %vm761, %v764, %v767
        %v769 = vsel %vm759, nan, %v768
        %s770 = scalar_lea.vmem %s132, 48 [#allocation5]
        %771 = vst [vmem:[%s770] sm:$0x77] %v769
        %v772 = vmul.f32 %v135, 8.0
        %v773 = vand.u32 2147483647, %v772
        %vm774 = vcmp.le.f32.partialorder %v773, 0.7853982
        %vm775 = vcmp.lt.s32.totalorder %v772, 0
        %v776 = vand.u32 %v772, 2139095040
        %v777 = vshrl.u32 %v776, 23
        %v778 = vsub.s32 %v777, 127
        %v779 = vand.u32 2147483647, %v772
        %v780 = vand.u32 %v779, 8388607
        %v781 = vor.u32 %v780, 8388608
        %v782 = vsub.s32 0, %v781
        %v783 = vadd.s32 %v778, 1
        %vm784 = vcmp.gt.s32.totalorder %v783, 0
        %v785 = vsel %vm784, %v783, 0
        %v786 = vshrl.u32 %v785, 5
        %v787 = vand.u32 %v785, 31
        %v788 = vsub.s32 32, %v787
        %v789 = vshrl.u32 683565275, %v788
        %v790 = vshll.u32 683565275, %v787
        %v791 = vshrl.u32 2475754826, %v788
        %v792 = vor.u32 %v790, %v791
        %v793 = vshll.u32 2475754826, %v787
        %v794 = vshrl.u32 2131351028, %v788
        %v795 = vor.u32 %v793, %v794
        %v796 = vshll.u32 2131351028, %v787
        %v797 = vshrl.u32 2102212464, %v788
        %v798 = vor.u32 %v796, %v797
        %v799 = vshll.u32 2102212464, %v787
        %v800 = vshrl.u32 920167782, %v788
        %v801 = vor.u32 %v799, %v800
        %v802 = vshll.u32 920167782, %v787
        %v803 = vshrl.u32 1326507024, %v788
        %v804 = vor.u32 %v802, %v803
        %vm805 = vcmp.lt.s32.totalorder %v786, 1
        %vm806 = vcmp.lt.s32.totalorder %v786, 2
        %vm807 = vcmp.lt.s32.totalorder %v786, 3
        %vm808 = vcmp.lt.s32.totalorder %v786, 4
        %v809 = vsel %vm805, %v789, %v792
        %v810 = vsel %vm808, %v798, 2102212464
        %v811 = vsel %vm807, %v795, %v810
        %v812 = vsel %vm806, %v809, %v811
        %v813 = vsel %vm805, %v792, %v795
        %v814 = vsel %vm808, %v801, 920167782
        %v815 = vsel %vm807, %v798, %v814
        %v816 = vsel %vm806, %v813, %v815
        %v817 = vsel %vm805, %v795, %v798
        %v818 = vsel %vm808, %v804, 1326507024
        %v819 = vsel %vm807, %v801, %v818
        %v820 = vsel %vm806, %v817, %v819
        %v821 = vshll.u32 %v781, 8
        %v822 = vmul.u32.u64.compose %v821, %v820
        %v823 = vextract.low.u32 %v822
        %v824 = vextract.high.u32 %v822
        %v825 = vmul.u32.u64.compose %v821, %v816
        %v826 = vextract.low.u32 %v825
        %v827 = vextract.high.u32 %v825
        %v828 = vmul.u32 %v821, %v812
        %v829 = vadd.s32 %v824, %v826
        %vm830 = vc.u32 %v824, %v826
        %v831 = vadd.s32 %v827, 1
        %v832 = vsel %vm830, %v831, %v827
        %v833 = vadd.s32 %v828, %v832
        %v834 = vadd.s32 %v833, 536870912
        %v835 = vshrl.u32 %v834, 30
        %v836 = vshll.u32 %v835, 30
        %v837 = vsub.s32 %v833, %v836
        %vm838 = vcmp.lt.s32.totalorder %v837, 0
        %v839 = vsub.s32 0, %v837
        %v840 = vsel %vm838, %v839, %v837
        %v841 = vclz %v840
        %v842 = vsub.s32 %v841, 2
        %vm843 = vcmp.gt.s32.totalorder 0, %v842
        %v844 = vsel %vm843, 0, %v842
        %v845 = vsub.s32 32, %v844
        %v846 = vshll.u32 %v837, %v844
        %v847 = vshrl.u32 %v829, %v845
        %v848 = vor.u32 %v846, %v847
        %v849 = vsub.s32 4294967266, %v844
        %v850 = vadd.s32 %v849, 127
        %v851 = vshll.u32 %v850, 23
        %v852 = vor.u32 4788187, %v851
        %v853 = vand.u32 2147483647, %v852
        %v855 = vcvt.s32.f32 %v848
        %v856 = vmul.f32 %v855, %v853
        %v857 = vxor.u32 %v856, 2147483648
        %v858 = vsel %vm775, %v857, %v856
        %v859 = vsub.s32 4, %v835
        %v860 = vsel %vm775, %v859, %v835
        %v861 = vsel %vm774, %v772, %v858
        %v862 = vsel %vm774, 0, %v860
        %v863 = vcosq.f32.pop %v861
        %v864 = vsinq.f32.pop %v861
        %vm865 = vweird.f32 %v772
        %v866 = vadd.s32 %v862, 3
        %v867 = vand.u32 %v866, 3
        %vm868 = vcmp.lt.s32.totalorder %v867, 2
        %vm869 = vcmp.eq.s32.totalorder %v867, 0
        %v870 = vxor.u32 %v864, 2147483648
        %v871 = vsel %vm869, %v863, %v870
        %vm872 = vcmp.eq.s32.totalorder %v867, 2
        %v873 = vxor.u32 %v863, 2147483648
        %v874 = vsel %vm872, %v873, %v864
        %v875 = vsel %vm868, %v871, %v874
        %v876 = vsel %vm865, nan, %v875
        %s877 = scalar_lea.vmem %s132, 56 [#allocation5]
        %878 = vst [vmem:[%s877] sm:$0x77] %v876
        %v879 = vand.u32 2147483647, %v772
        %vm880 = vcmp.le.f32.partialorder %v879, 0.7853982
        %vm881 = vcmp.lt.s32.totalorder %v772, 0
        %v882 = vand.u32 %v772, 2139095040
        %v883 = vshrl.u32 %v882, 23
        %v884 = vsub.s32 %v883, 127
        %v885 = vand.u32 2147483647, %v772
        %v886 = vand.u32 %v885, 8388607
        %v887 = vor.u32 %v886, 8388608
        %v888 = vsub.s32 0, %v887
        %v889 = vadd.s32 %v884, 1
        %vm890 = vcmp.gt.s32.totalorder %v889, 0
        %v891 = vsel %vm890, %v889, 0
        %v892 = vshrl.u32 %v891, 5
        %v893 = vand.u32 %v891, 31
        %v894 = vsub.s32 32, %v893
        %v895 = vshrl.u32 683565275, %v894
        %v896 = vshll.u32 683565275, %v893
        %v897 = vshrl.u32 2475754826, %v894
        %v898 = vor.u32 %v896, %v897
        %v899 = vshll.u32 2475754826, %v893
        %v900 = vshrl.u32 2131351028, %v894
        %v901 = vor.u32 %v899, %v900
        %v902 = vshll.u32 2131351028, %v893
        %v903 = vshrl.u32 2102212464, %v894
        %v904 = vor.u32 %v902, %v903
        %v905 = vshll.u32 2102212464, %v893
        %v906 = vshrl.u32 920167782, %v894
        %v907 = vor.u32 %v905, %v906
        %v908 = vshll.u32 920167782, %v893
        %v909 = vshrl.u32 1326507024, %v894
        %v910 = vor.u32 %v908, %v909
        %vm911 = vcmp.lt.s32.totalorder %v892, 1
        %vm912 = vcmp.lt.s32.totalorder %v892, 2
        %vm913 = vcmp.lt.s32.totalorder %v892, 3
        %vm914 = vcmp.lt.s32.totalorder %v892, 4
        %v915 = vsel %vm911, %v895, %v898
        %v916 = vsel %vm914, %v904, 2102212464
        %v917 = vsel %vm913, %v901, %v916
        %v918 = vsel %vm912, %v915, %v917
        %v919 = vsel %vm911, %v898, %v901
        %v920 = vsel %vm914, %v907, 920167782
        %v921 = vsel %vm913, %v904, %v920
        %v922 = vsel %vm912, %v919, %v921
        %v923 = vsel %vm911, %v901, %v904
        %v924 = vsel %vm914, %v910, 1326507024
        %v925 = vsel %vm913, %v907, %v924
        %v926 = vsel %vm912, %v923, %v925
        %v927 = vshll.u32 %v887, 8
        %v928 = vmul.u32.u64.compose %v927, %v926
        %v929 = vextract.low.u32 %v928
        %v930 = vextract.high.u32 %v928
        %v931 = vmul.u32.u64.compose %v927, %v922
        %v932 = vextract.low.u32 %v931
        %v933 = vextract.high.u32 %v931
        %v934 = vmul.u32 %v927, %v918
        %v935 = vadd.s32 %v930, %v932
        %vm936 = vc.u32 %v930, %v932
        %v937 = vadd.s32 %v933, 1
        %v938 = vsel %vm936, %v937, %v933
        %v939 = vadd.s32 %v934, %v938
        %v940 = vadd.s32 %v939, 536870912
        %v941 = vshrl.u32 %v940, 30
        %v942 = vshll.u32 %v941, 30
        %v943 = vsub.s32 %v939, %v942
        %vm944 = vcmp.lt.s32.totalorder %v943, 0
        %v945 = vsub.s32 0, %v943
        %v946 = vsel %vm944, %v945, %v943
        %v947 = vclz %v946
        %v948 = vsub.s32 %v947, 2
        %vm949 = vcmp.gt.s32.totalorder 0, %v948
        %v950 = vsel %vm949, 0, %v948
        %v951 = vsub.s32 32, %v950
        %v952 = vshll.u32 %v943, %v950
        %v953 = vshrl.u32 %v935, %v951
        %v954 = vor.u32 %v952, %v953
        %v955 = vsub.s32 4294967266, %v950
        %v956 = vadd.s32 %v955, 127
        %v957 = vshll.u32 %v956, 23
        %v958 = vor.u32 4788187, %v957
        %v959 = vand.u32 2147483647, %v958
        %v961 = vcvt.s32.f32 %v954
        %v962 = vmul.f32 %v961, %v959
        %v963 = vxor.u32 %v962, 2147483648
        %v964 = vsel %vm881, %v963, %v962
        %v965 = vsub.s32 4, %v941
        %v966 = vsel %vm881, %v965, %v941
        %v967 = vsel %vm880, %v772, %v964
        %v968 = vsel %vm880, 0, %v966
        %v969 = vcosq.f32.pop %v967
        %v970 = vsinq.f32.pop %v967
        %vm971 = vweird.f32 %v772
        %v972 = vand.u32 %v968, 3
        %vm973 = vcmp.lt.s32.totalorder %v972, 2
        %vm974 = vcmp.eq.s32.totalorder %v972, 0
        %v975 = vxor.u32 %v970, 2147483648
        %v976 = vsel %vm974, %v969, %v975
        %vm977 = vcmp.eq.s32.totalorder %v972, 2
        %v978 = vxor.u32 %v969, 2147483648
        %v979 = vsel %vm977, %v978, %v970
        %v980 = vsel %vm973, %v976, %v979
        %v981 = vsel %vm971, nan, %v980
        %s982 = scalar_lea.vmem %s132, 64 [#allocation5]
        %983 = vst [vmem:[%s982] sm:$0x77] %v981
        %s984 = sand.u32 %s52, 1
        %s985 = scalar_lea.sflag [#allocation4], %s984
        %s986 = sand.u32 %s52, 1
        %s987 = smul.addr %s986, 72
        %s988 = scalar_lea.vmem [#allocation5], %s987
        // Predicated region
        $region29: #{tpu_custom_call.1} parent=23 // pred_check
          %p989 = pneg %p62
        $region30: #{tpu_custom_call.1} parent=23 // pred_check_branch
          %991 = sbr.rel (%p989) target = $region32
        $region31: #{tpu_custom_call.1} parent=23 // pred_region
          %s992 = smul.u32 2, %s18
          %s994 = ssub.s32 1152, 1152
          %995 = vsyncadd %s985, %s994
          %s996 = smul.addr %s992, 64
          %s997 = scalar_lea.hbm %s1, %s996
          %s998 = sshll.u32 %s988, 4
          %s999 = int_to_ptr.vmem [resolvable:$true] %s998
          %1004 = dma.vmem_to_hbm [thread:$0]  %s999, 1152, %s997, %s985, 128, 512, 8
        $region32: #{tpu_custom_call.1} parent=23 // pred_fallthru
          _
      $region24: #{tpu_custom_call.1} parent=5 // pred_fallthru
        _
      %p1005 = scmp.le.s32.totalorder 2, %s13
      // Predicated region
      $region33: #{tpu_custom_call.1} parent=5 // pred_check
        %p1006 = pneg %p1005
      $region34: #{tpu_custom_call.1} parent=5 // pred_check_branch
        %1008 = sbr.rel (%p1006) target = $region36
      $region35: #{tpu_custom_call.1} parent=5 // pred_region
        %s1009 = ssub.s32 %s13, 2
        // Predicated region
        $region37: #{tpu_custom_call.1} parent=35 // pred_check
          %p1010 = pneg %p68
        $region38: #{tpu_custom_call.1} parent=35 // pred_check_branch
          %1012 = sbr.rel (%p1010) target = $region40
        $region39: #{tpu_custom_call.1} parent=35 // pred_region
          %s1013 = sand.u32 %s53, 1
          %s1014 = scalar_lea.sflag [#allocation4], %s1013
          %s1015 = sand.u32 %s53, 1
          %s1016 = smul.addr %s1015, 72
          %s1017 = scalar_lea.vmem [#allocation5], %s1016
          %1018 = dma.done %s1014, 1152
        $region40: #{tpu_custom_call.1} parent=35 // pred_fallthru
          _
      $region36: #{tpu_custom_call.1} parent=5 // pred_fallthru
        _
    $region6: #{tpu_custom_call.1} parent=1 // loop_footer
      %s17 = sadd.s32 1, %s13
    $region7: #{tpu_custom_call.1} parent=1 // loop_footer_branch
      %12 = sbr.rel target = $region3
    $region8: #{tpu_custom_call.1} parent=1 // loop_exit
      _
    %1019 = vsyncpa [#allocation3], 1
    %s1020 = scalar_lea.sflag [#allocation3], 1
    %1021 = vsyncpa %s1020, 1
    %1022 = vsyncpa [#allocation4], 1
    %s1023 = scalar_lea.sflag [#allocation4], 1
    %1024 = vsyncpa %s1023, 1

</llo_original>
